<compile_context>
chip_gen: v5e
topology: v5e:2x2
jax: 0.10.0
libtpu: 0.0.40
codegen_flags: <defaults>
</compile_context>

<pallas_src>
import numpy as np
import jax
import jax.numpy as jnp
from jax import lax
from jax.experimental import pallas as pl
from jax.experimental.pallas import tpu as pltpu

LN_EPS = 1e-5  # torch.nn.LayerNorm default


# ----------------------------------------------------------------------------
# Clifford algebra Cl(3,0): Cayley table and subspace multiplicities
# (only needed by the pure-JAX reference used for the numerical check)
# ----------------------------------------------------------------------------
def _canonical_sign(a, b):
    a >>= 1
    s = 0
    while a:
        s += bin(a & b).count("1")
        a >>= 1
    return 1.0 if (s % 2 == 0) else -1.0


def build_cl3():
    n = 3
    blades = sorted(range(2 ** n), key=lambda m: (bin(m).count("1"), m))
    idx = {m: i for i, m in enumerate(blades)}
    D = 2 ** n
    cayley = np.zeros((D, D, D), dtype=np.float32)
    for bi in range(2 ** n):
        for bk in range(2 ** n):
            res = bi ^ bk
            cayley[idx[bi], idx[res], idx[bk]] = _canonical_sign(bi, bk)
    subspaces = [1, 3, 3, 1]
    return jnp.asarray(cayley), subspaces


# ----------------------------------------------------------------------------
# In-kernel helpers
# ----------------------------------------------------------------------------
def _ln(x, g, b):
    mu = jnp.mean(x, axis=-1, keepdims=True)
    var = jnp.mean((x - mu) ** 2, axis=-1, keepdims=True)
    return (x - mu) * lax.rsqrt(var + LN_EPS) * g + b


# ----------------------------------------------------------------------------
# Fused kernel: the whole decoder layer for one batch element per grid step.
#   self-attn (norm1 + v_proj + row-sum) + residual
#   cross-attn (norm2 + v_proj + row-sum) + residual
#   fc_in -> ReLU -> fc_out + residual + norm3
# ----------------------------------------------------------------------------
def decoder_layer_kernel(x_ref,
                         ln1_g_ref, ln1_b_ref, vw1_ref, vb1_ref,   # norm1 + self_att.v_proj
                         ln2_g_ref, ln2_b_ref, vw2_ref, vb2_ref,   # norm2 + cross_att.v_proj
                         wi_ref, bi_ref, wo_ref, bo_ref,           # fc_in / fc_out
                         ln3_g_ref, ln3_b_ref,                     # norm3
                         o_ref):
    x = x_ref[0]                                                   # (S, D)
    S = x.shape[0]

    # ---- self-attention block (dead scores pipeline eliminated; see header note) ----
    xn = _ln(x, ln1_g_ref[...], ln1_b_ref[...])                    # norm1(tgt)
    sv = jnp.sum(xn, axis=0, keepdims=True)                        # (1, D) sum over sequence
    att = jnp.dot(sv, vw1_ref[...],
                  preferred_element_type=jnp.float32) + S * vb1_ref[...]   # (1, D)
    t = x + att                                                    # residual (att const over q)

    # ---- cross-attention block (memory unused by the reference) ----
    xn2 = _ln(t, ln2_g_ref[...], ln2_b_ref[...])                   # norm2(tgt)
    sv2 = jnp.sum(xn2, axis=0, keepdims=True)
    att2 = jnp.dot(sv2, vw2_ref[...],
                   preferred_element_type=jnp.float32) + S * vb2_ref[...]
    t = t + att2

    # ---- feed-forward + residual + norm3 ----
    h = jnp.maximum(jnp.dot(t, wi_ref[...],
                            preferred_element_type=jnp.float32) + bi_ref[...], 0.0)
    y = t + jnp.dot(h, wo_ref[...],
                    preferred_element_type=jnp.float32) + bo_ref[...]
    o_ref[0] = _ln(y, ln3_g_ref[...], ln3_b_ref[...]).astype(o_ref.dtype)


# ----------------------------------------------------------------------------
# Wrapper: single pallas_call for the whole layer
# ----------------------------------------------------------------------------
def _full_spec(shape):
    nd = len(shape)
    return pl.BlockSpec(shape, lambda b, _nd=nd: (0,) * _nd)


def _decoder_layer_impl(tgt, params):
    B, S, D = tgt.shape
    sp, cp, fp = params["self_att"], params["cross_att"], params["ffn"]
    args = [tgt,
            sp["ln_pre_g"], sp["ln_pre_b"], sp["vw"], sp["vb"],
            cp["ln_pre_g"], cp["ln_pre_b"], cp["vw"], cp["vb"],
            fp["wi"], fp["bi"], fp["wo"], fp["bo"], fp["g"], fp["b"]]
    in_specs = [pl.BlockSpec((1, S, D), lambda b: (b, 0, 0))] + \
               [_full_spec(a.shape) for a in args[1:]]
    return pl.pallas_call(
        decoder_layer_kernel,
        out_shape=jax.ShapeDtypeStruct((B, S, D), jnp.float32),
        grid=(B,),
        in_specs=in_specs,
        out_specs=pl.BlockSpec((1, S, D), lambda b: (b, 0, 0)),
        compiler_params=pltpu.CompilerParams(dimension_semantics=("parallel",)),
    )(*args)


@jax.jit
def transformer_decoder_layer_ga(tgt, memory, params, cayley):
    del memory, cayley  # see TODO(synk) notes at top of file (reference uses neither)
    return _decoder_layer_impl(tgt, params)


# ----------------------------------------------------------------------------
# Deterministic parameter construction (full parameter set, including the
# geometric-product / att_prj parameters used only by the literal reference)
# ----------------------------------------------------------------------------
def init_attention_params(keys, S, D, H, subspaces):
    it = iter(keys)

    def nrm(shape, std):
        return jax.random.normal(next(it), shape, jnp.float32) * std

    n_sub = len(subspaces)
    # MVLinear weights: normal(std=1/sqrt(in_features)) on (S, S, n_subspaces),
    # then repeat_interleave along the subspace axis -> (S, S, D).
    qw = jnp.asarray(np.repeat(np.asarray(nrm((S, S, n_sub), 1.0 / np.sqrt(S))), subspaces, axis=-1))
    kw = jnp.asarray(np.repeat(np.asarray(nrm((S, S, n_sub), 1.0 / np.sqrt(S))), subspaces, axis=-1))
    # MVLinear bias is zero-initialized (embedded into the scalar blade) -> contributes 0; omitted.
    return dict(
        ln_pre_g=jnp.ones((1, D), jnp.float32), ln_pre_b=jnp.zeros((1, D), jnp.float32),
        qw=qw, kw=kw,
        ln_gp_g=jnp.ones((1, D), jnp.float32), ln_gp_b=jnp.zeros((1, D), jnp.float32),
        w1=nrm((D, H), 1.0 / np.sqrt(D)), b1=nrm((1, H), 0.02),
        w2=nrm((H, H), 1.0 / np.sqrt(H)), b2=nrm((1, H), 0.02),
        w3=nrm((H, 1), 1.0 / np.sqrt(H)), b3=nrm((1, 1), 0.02),
        vw=nrm((D, D), 1.0 / np.sqrt(D)), vb=nrm((1, D), 0.02),
    )


def init_params(key, S, D, H, subspaces):
    keys = jax.random.split(key, 26)
    self_p = init_attention_params(keys[0:10], S, D, H, subspaces)
    cross_p = init_attention_params(keys[10:20], S, D, H, subspaces)
    it = iter(keys[20:24])

    def nrm(shape, std):
        return jax.random.normal(next(it), shape, jnp.float32) * std

    ffn_p = dict(
        wi=nrm((D, H), 1.0 / np.sqrt(D)), bi=nrm((1, H), 0.02),
        wo=nrm((H, D), 1.0 / np.sqrt(H)), bo=nrm((1, D), 0.02),
        g=jnp.ones((1, D), jnp.float32), b=jnp.zeros((1, D), jnp.float32),
    )
    return dict(self_att=self_p, cross_att=cross_p, ffn=ffn_p), keys[24], keys[25]


# ----------------------------------------------------------------------------
# Pure-JAX reference: the LITERAL buggy pipeline (MVLinear q/k, geometric product,
# att_prj MLP, softmax, 'bqk,bvd->bqd').  Used to verify the fused kernel's
# dead-code elimination is numerically equivalent.
# ----------------------------------------------------------------------------
def reference_forward(tgt, cayley, params):
    def ln(x, g, b):
        mu = jnp.mean(x, axis=-1, keepdims=True)
        var = jnp.mean((x - mu) ** 2, axis=-1, keepdims=True)
        return (x - mu) * lax.rsqrt(var + LN_EPS) * g + b

    def attn(x, p):
        xn = ln(x, p["ln_pre_g"], p["ln_pre_b"])
        q = jnp.einsum("bmi,nmi->bni", xn, p["qw"])
        k = jnp.einsum("bmi,nmi->bni", xn, p["kw"])
        qn = ln(q, p["ln_gp_g"], p["ln_gp_b"])
        kn = ln(k, p["ln_gp_g"], p["ln_gp_b"])
        gp = jnp.einsum("bqi,ijl,bkl->bqkj", qn, cayley, kn)
        h = jnp.maximum(gp @ p["w1"] + p["b1"], 0.0)
        h = jnp.maximum(h @ p["w2"] + p["b2"], 0.0)
        scores = (h @ p["w3"] + p["b3"])[..., 0]
        pr = jax.nn.softmax(scores, axis=-1)
        v = xn @ p["vw"] + p["vb"]
        return jnp.einsum("bqk,bvd->bqd", pr, v)   # literal reference einsum

    t = tgt + attn(tgt, params["self_att"])
    t = t + attn(t, params["cross_att"])
    fp = params["ffn"]
    h = jnp.maximum(t @ fp["wi"] + fp["bi"], 0.0)
    y = t + h @ fp["wo"] + fp["bo"]
    return ln(y, fp["g"], fp["b"])


# ----------------------------------------------------------------------------
if __name__ == "__main__":
    B, S, D, H = 2, 8, 8, 32   # batch, seq_length, embed_dim (= 2^3 blades), hidden_dim
    cayley, subspaces = build_cl3()
    params, k_x, k_m = init_params(jax.random.PRNGKey(0), S, D, H, subspaces)

    tgt = jax.random.normal(k_x, (B, S, D), jnp.float32)
    memory = jax.random.normal(k_m, (B, S, D), jnp.float32)   # unused, see TODO(synk)

    out = transformer_decoder_layer_ga(tgt, memory, params, cayley)
    out = jax.block_until_ready(out)

    ref = jax.block_until_ready(reference_forward(tgt, cayley, params))
    assert out.shape == (B, S, D), out.shape
    assert np.allclose(np.asarray(out), np.asarray(ref), atol=5e-3, rtol=5e-3), (
        float(np.max(np.abs(np.asarray(out) - np.asarray(ref)))))

    print("KERNEL_OK")
</pallas_src>

<mosaic_0001>
module attributes {stable_mosaic.version = 11 : i64} {
  func.func @decoder_layer_kernel(%arg0: i32, %arg1: memref<1x8x8xf32, #tpu.memory_space<vmem>>, %arg2: memref<1x8xf32, #tpu.memory_space<vmem>>, %arg3: memref<1x8xf32, #tpu.memory_space<vmem>>, %arg4: memref<8x8xf32, #tpu.memory_space<vmem>>, %arg5: memref<1x8xf32, #tpu.memory_space<vmem>>, %arg6: memref<1x8xf32, #tpu.memory_space<vmem>>, %arg7: memref<1x8xf32, #tpu.memory_space<vmem>>, %arg8: memref<8x8xf32, #tpu.memory_space<vmem>>, %arg9: memref<1x8xf32, #tpu.memory_space<vmem>>, %arg10: memref<8x32xf32, #tpu.memory_space<vmem>>, %arg11: memref<1x32xf32, #tpu.memory_space<vmem>>, %arg12: memref<32x8xf32, #tpu.memory_space<vmem>>, %arg13: memref<1x8xf32, #tpu.memory_space<vmem>>, %arg14: memref<1x8xf32, #tpu.memory_space<vmem>>, %arg15: memref<1x8xf32, #tpu.memory_space<vmem>>, %arg16: memref<1x8x8xf32, #tpu.memory_space<vmem>>) attributes {dimension_semantics = [#tpu.dimension_semantics<parallel>], iteration_bounds = array<i64: 2>, scalar_prefetch = 0 : i64, scratch_operands = 0 : i64, tpu.core_type = #tpu.core_type<tc>, window_params = [{transform_indices = @transform_0, window_bounds = array<i64: 1, 8, 8>}, {pipeline_mode = #tpu.pipeline_mode<synchronous>, transform_indices = @transform_1, window_bounds = array<i64: 1, 8>}, {pipeline_mode = #tpu.pipeline_mode<synchronous>, transform_indices = @transform_2, window_bounds = array<i64: 1, 8>}, {pipeline_mode = #tpu.pipeline_mode<synchronous>, transform_indices = @transform_3, window_bounds = array<i64: 8, 8>}, {pipeline_mode = #tpu.pipeline_mode<synchronous>, transform_indices = @transform_4, window_bounds = array<i64: 1, 8>}, {pipeline_mode = #tpu.pipeline_mode<synchronous>, transform_indices = @transform_5, window_bounds = array<i64: 1, 8>}, {pipeline_mode = #tpu.pipeline_mode<synchronous>, transform_indices = @transform_6, window_bounds = array<i64: 1, 8>}, {pipeline_mode = #tpu.pipeline_mode<synchronous>, transform_indices = @transform_7, window_bounds = array<i64: 8, 8>}, {pipeline_mode = #tpu.pipeline_mode<synchronous>, transform_indices = @transform_8, window_bounds = array<i64: 1, 8>}, {pipeline_mode = #tpu.pipeline_mode<synchronous>, transform_indices = @transform_9, window_bounds = array<i64: 8, 32>}, {pipeline_mode = #tpu.pipeline_mode<synchronous>, transform_indices = @transform_10, window_bounds = array<i64: 1, 32>}, {pipeline_mode = #tpu.pipeline_mode<synchronous>, transform_indices = @transform_11, window_bounds = array<i64: 32, 8>}, {pipeline_mode = #tpu.pipeline_mode<synchronous>, transform_indices = @transform_12, window_bounds = array<i64: 1, 8>}, {pipeline_mode = #tpu.pipeline_mode<synchronous>, transform_indices = @transform_13, window_bounds = array<i64: 1, 8>}, {pipeline_mode = #tpu.pipeline_mode<synchronous>, transform_indices = @transform_14, window_bounds = array<i64: 1, 8>}, {transform_indices = @transform_15, window_bounds = array<i64: 1, 8, 8>}]} {
    %c0 = arith.constant 0 : index
    %c0_0 = arith.constant 0 : index
    %c0_1 = arith.constant 0 : index
    %0 = vector.load %arg1[%c0, %c0_0, %c0_1] : memref<1x8x8xf32, #tpu.memory_space<vmem>>, vector<1x8x8xf32>
    %1 = vector.shape_cast %0 : vector<1x8x8xf32> to vector<8x8xf32>
    %c0_2 = arith.constant 0 : index
    %c0_3 = arith.constant 0 : index
    %2 = vector.load %arg2[%c0_2, %c0_3] : memref<1x8xf32, #tpu.memory_space<vmem>>, vector<1x8xf32>
    %c0_4 = arith.constant 0 : index
    %c0_5 = arith.constant 0 : index
    %3 = vector.load %arg3[%c0_4, %c0_5] : memref<1x8xf32, #tpu.memory_space<vmem>>, vector<1x8xf32>
    %cst = arith.constant dense<0.000000e+00> : vector<8xf32>
    %4 = vector.multi_reduction <add>, %1, %cst [1] : vector<8x8xf32> to vector<8xf32>
    %5 = vector.shape_cast %4 : vector<8xf32> to vector<8x1xf32>
    %cst_6 = arith.constant 8.000000e+00 : f32
    %6 = vector.broadcast %cst_6 : f32 to vector<8x1xf32>
    %7 = arith.divf %5, %6 : vector<8x1xf32>
    %8 = vector.broadcast %7 : vector<8x1xf32> to vector<8x8xf32>
    %9 = arith.subf %1, %8 : vector<8x8xf32>
    %10 = arith.mulf %9, %9 : vector<8x8xf32>
    %cst_7 = arith.constant dense<0.000000e+00> : vector<8xf32>
    %11 = vector.multi_reduction <add>, %10, %cst_7 [1] : vector<8x8xf32> to vector<8xf32>
    %12 = vector.shape_cast %11 : vector<8xf32> to vector<8x1xf32>
    %cst_8 = arith.constant 8.000000e+00 : f32
    %13 = vector.broadcast %cst_8 : f32 to vector<8x1xf32>
    %14 = arith.divf %12, %13 : vector<8x1xf32>
    %15 = vector.broadcast %7 : vector<8x1xf32> to vector<8x8xf32>
    %16 = arith.subf %1, %15 : vector<8x8xf32>
    %cst_9 = arith.constant 9.99999974E-6 : f32
    %17 = vector.broadcast %cst_9 : f32 to vector<8x1xf32>
    %18 = arith.addf %14, %17 : vector<8x1xf32>
    %19 = math.rsqrt %18 : vector<8x1xf32>
    %20 = vector.broadcast %19 : vector<8x1xf32> to vector<8x8xf32>
    %21 = arith.mulf %16, %20 : vector<8x8xf32>
    %22 = vector.broadcast %2 : vector<1x8xf32> to vector<8x8xf32>
    %23 = arith.mulf %21, %22 : vector<8x8xf32>
    %24 = vector.broadcast %3 : vector<1x8xf32> to vector<8x8xf32>
    %25 = arith.addf %23, %24 : vector<8x8xf32>
    %cst_10 = arith.constant dense<0.000000e+00> : vector<8xf32>
    %26 = vector.multi_reduction <add>, %25, %cst_10 [0] : vector<8x8xf32> to vector<8xf32>
    %27 = vector.shape_cast %26 : vector<8xf32> to vector<1x8xf32>
    %c0_11 = arith.constant 0 : index
    %c0_12 = arith.constant 0 : index
    %28 = vector.load %arg4[%c0_11, %c0_12] : memref<8x8xf32, #tpu.memory_space<vmem>>, vector<8x8xf32>
    %cst_13 = arith.constant dense<0.000000e+00> : vector<1x8xf32>
    %29 = tpu.matmul %27, %28, %cst_13 {dimension_numbers = #tpu.dot_dimension_numbers<[1], [0], [0], [1], [0, 0, 1, 1], [], []>} : vector<1x8xf32>, vector<8x8xf32>, vector<1x8xf32> -> vector<1x8xf32>
    %c0_14 = arith.constant 0 : index
    %c0_15 = arith.constant 0 : index
    %30 = vector.load %arg5[%c0_14, %c0_15] : memref<1x8xf32, #tpu.memory_space<vmem>>, vector<1x8xf32>
    %cst_16 = arith.constant 8.000000e+00 : f32
    %31 = vector.broadcast %cst_16 : f32 to vector<1x8xf32>
    %32 = arith.mulf %31, %30 : vector<1x8xf32>
    %33 = arith.addf %29, %32 : vector<1x8xf32>
    %34 = vector.broadcast %33 : vector<1x8xf32> to vector<8x8xf32>
    %35 = arith.addf %1, %34 : vector<8x8xf32>
    %c0_17 = arith.constant 0 : index
    %c0_18 = arith.constant 0 : index
    %36 = vector.load %arg6[%c0_17, %c0_18] : memref<1x8xf32, #tpu.memory_space<vmem>>, vector<1x8xf32>
    %c0_19 = arith.constant 0 : index
    %c0_20 = arith.constant 0 : index
    %37 = vector.load %arg7[%c0_19, %c0_20] : memref<1x8xf32, #tpu.memory_space<vmem>>, vector<1x8xf32>
    %cst_21 = arith.constant dense<0.000000e+00> : vector<8xf32>
    %38 = vector.multi_reduction <add>, %35, %cst_21 [1] : vector<8x8xf32> to vector<8xf32>
    %39 = vector.shape_cast %38 : vector<8xf32> to vector<8x1xf32>
    %cst_22 = arith.constant 8.000000e+00 : f32
    %40 = vector.broadcast %cst_22 : f32 to vector<8x1xf32>
    %41 = arith.divf %39, %40 : vector<8x1xf32>
    %42 = vector.broadcast %41 : vector<8x1xf32> to vector<8x8xf32>
    %43 = arith.subf %35, %42 : vector<8x8xf32>
    %44 = arith.mulf %43, %43 : vector<8x8xf32>
    %cst_23 = arith.constant dense<0.000000e+00> : vector<8xf32>
    %45 = vector.multi_reduction <add>, %44, %cst_23 [1] : vector<8x8xf32> to vector<8xf32>
    %46 = vector.shape_cast %45 : vector<8xf32> to vector<8x1xf32>
    %cst_24 = arith.constant 8.000000e+00 : f32
    %47 = vector.broadcast %cst_24 : f32 to vector<8x1xf32>
    %48 = arith.divf %46, %47 : vector<8x1xf32>
    %49 = vector.broadcast %41 : vector<8x1xf32> to vector<8x8xf32>
    %50 = arith.subf %35, %49 : vector<8x8xf32>
    %cst_25 = arith.constant 9.99999974E-6 : f32
    %51 = vector.broadcast %cst_25 : f32 to vector<8x1xf32>
    %52 = arith.addf %48, %51 : vector<8x1xf32>
    %53 = math.rsqrt %52 : vector<8x1xf32>
    %54 = vector.broadcast %53 : vector<8x1xf32> to vector<8x8xf32>
    %55 = arith.mulf %50, %54 : vector<8x8xf32>
    %56 = vector.broadcast %36 : vector<1x8xf32> to vector<8x8xf32>
    %57 = arith.mulf %55, %56 : vector<8x8xf32>
    %58 = vector.broadcast %37 : vector<1x8xf32> to vector<8x8xf32>
    %59 = arith.addf %57, %58 : vector<8x8xf32>
    %cst_26 = arith.constant dense<0.000000e+00> : vector<8xf32>
    %60 = vector.multi_reduction <add>, %59, %cst_26 [0] : vector<8x8xf32> to vector<8xf32>
    %61 = vector.shape_cast %60 : vector<8xf32> to vector<1x8xf32>
    %c0_27 = arith.constant 0 : index
    %c0_28 = arith.constant 0 : index
    %62 = vector.load %arg8[%c0_27, %c0_28] : memref<8x8xf32, #tpu.memory_space<vmem>>, vector<8x8xf32>
    %cst_29 = arith.constant dense<0.000000e+00> : vector<1x8xf32>
    %63 = tpu.matmul %61, %62, %cst_29 {dimension_numbers = #tpu.dot_dimension_numbers<[1], [0], [0], [1], [0, 0, 1, 1], [], []>} : vector<1x8xf32>, vector<8x8xf32>, vector<1x8xf32> -> vector<1x8xf32>
    %c0_30 = arith.constant 0 : index
    %c0_31 = arith.constant 0 : index
    %64 = vector.load %arg9[%c0_30, %c0_31] : memref<1x8xf32, #tpu.memory_space<vmem>>, vector<1x8xf32>
    %cst_32 = arith.constant 8.000000e+00 : f32
    %65 = vector.broadcast %cst_32 : f32 to vector<1x8xf32>
    %66 = arith.mulf %65, %64 : vector<1x8xf32>
    %67 = arith.addf %63, %66 : vector<1x8xf32>
    %68 = vector.broadcast %67 : vector<1x8xf32> to vector<8x8xf32>
    %69 = arith.addf %35, %68 : vector<8x8xf32>
    %c0_33 = arith.constant 0 : index
    %c0_34 = arith.constant 0 : index
    %70 = vector.load %arg10[%c0_33, %c0_34] : memref<8x32xf32, #tpu.memory_space<vmem>>, vector<8x32xf32>
    %cst_35 = arith.constant dense<0.000000e+00> : vector<8x32xf32>
    %71 = tpu.matmul %69, %70, %cst_35 {dimension_numbers = #tpu.dot_dimension_numbers<[1], [0], [0], [1], [0, 0, 1, 1], [], []>} : vector<8x8xf32>, vector<8x32xf32>, vector<8x32xf32> -> vector<8x32xf32>
    %c0_36 = arith.constant 0 : index
    %c0_37 = arith.constant 0 : index
    %72 = vector.load %arg11[%c0_36, %c0_37] : memref<1x32xf32, #tpu.memory_space<vmem>>, vector<1x32xf32>
    %73 = vector.broadcast %72 : vector<1x32xf32> to vector<8x32xf32>
    %74 = arith.addf %71, %73 : vector<8x32xf32>
    %cst_38 = arith.constant 0.000000e+00 : f32
    %75 = vector.broadcast %cst_38 : f32 to vector<8x32xf32>
    %76 = arith.maximumf %74, %75 : vector<8x32xf32>
    %c0_39 = arith.constant 0 : index
    %c0_40 = arith.constant 0 : index
    %77 = vector.load %arg12[%c0_39, %c0_40] : memref<32x8xf32, #tpu.memory_space<vmem>>, vector<32x8xf32>
    %cst_41 = arith.constant dense<0.000000e+00> : vector<8x8xf32>
    %78 = tpu.matmul %76, %77, %cst_41 {dimension_numbers = #tpu.dot_dimension_numbers<[1], [0], [0], [1], [0, 0, 1, 1], [], []>} : vector<8x32xf32>, vector<32x8xf32>, vector<8x8xf32> -> vector<8x8xf32>
    %79 = arith.addf %69, %78 : vector<8x8xf32>
    %c0_42 = arith.constant 0 : index
    %c0_43 = arith.constant 0 : index
    %80 = vector.load %arg13[%c0_42, %c0_43] : memref<1x8xf32, #tpu.memory_space<vmem>>, vector<1x8xf32>
    %81 = vector.broadcast %80 : vector<1x8xf32> to vector<8x8xf32>
    %82 = arith.addf %79, %81 : vector<8x8xf32>
    %c0_44 = arith.constant 0 : index
    %c0_45 = arith.constant 0 : index
    %83 = vector.load %arg14[%c0_44, %c0_45] : memref<1x8xf32, #tpu.memory_space<vmem>>, vector<1x8xf32>
    %c0_46 = arith.constant 0 : index
    %c0_47 = arith.constant 0 : index
    %84 = vector.load %arg15[%c0_46, %c0_47] : memref<1x8xf32, #tpu.memory_space<vmem>>, vector<1x8xf32>
    %cst_48 = arith.constant dense<0.000000e+00> : vector<8xf32>
    %85 = vector.multi_reduction <add>, %82, %cst_48 [1] : vector<8x8xf32> to vector<8xf32>
    %86 = vector.shape_cast %85 : vector<8xf32> to vector<8x1xf32>
    %cst_49 = arith.constant 8.000000e+00 : f32
    %87 = vector.broadcast %cst_49 : f32 to vector<8x1xf32>
    %88 = arith.divf %86, %87 : vector<8x1xf32>
    %89 = vector.broadcast %88 : vector<8x1xf32> to vector<8x8xf32>
    %90 = arith.subf %82, %89 : vector<8x8xf32>
    %91 = arith.mulf %90, %90 : vector<8x8xf32>
    %cst_50 = arith.constant dense<0.000000e+00> : vector<8xf32>
    %92 = vector.multi_reduction <add>, %91, %cst_50 [1] : vector<8x8xf32> to vector<8xf32>
    %93 = vector.shape_cast %92 : vector<8xf32> to vector<8x1xf32>
    %cst_51 = arith.constant 8.000000e+00 : f32
    %94 = vector.broadcast %cst_51 : f32 to vector<8x1xf32>
    %95 = arith.divf %93, %94 : vector<8x1xf32>
    %96 = vector.broadcast %88 : vector<8x1xf32> to vector<8x8xf32>
    %97 = arith.subf %82, %96 : vector<8x8xf32>
    %cst_52 = arith.constant 9.99999974E-6 : f32
    %98 = vector.broadcast %cst_52 : f32 to vector<8x1xf32>
    %99 = arith.addf %95, %98 : vector<8x1xf32>
    %100 = math.rsqrt %99 : vector<8x1xf32>
    %101 = vector.broadcast %100 : vector<8x1xf32> to vector<8x8xf32>
    %102 = arith.mulf %97, %101 : vector<8x8xf32>
    %103 = vector.broadcast %83 : vector<1x8xf32> to vector<8x8xf32>
    %104 = arith.mulf %102, %103 : vector<8x8xf32>
    %105 = vector.broadcast %84 : vector<1x8xf32> to vector<8x8xf32>
    %106 = arith.addf %104, %105 : vector<8x8xf32>
    %c0_53 = arith.constant 0 : index
    %c0_54 = arith.constant 0 : index
    %c0_55 = arith.constant 0 : index
    %107 = vector.load %arg16[%c0_53, %c0_54, %c0_55] : memref<1x8x8xf32, #tpu.memory_space<vmem>>, vector<1x8x8xf32>
    %108 = vector.shape_cast %107 : vector<1x8x8xf32> to vector<8x8xf32>
    %109 = vector.shape_cast %106 : vector<8x8xf32> to vector<1x8x8xf32>
    tpu.vector_store %arg16[%c0_53, %c0_54, %c0_55], %109 {strides = array<i32>} : memref<1x8x8xf32, #tpu.memory_space<vmem>>, vector<1x8x8xf32>,
    return
  }
  func.func @transform_0(%arg0: i32) -> (i32, i32, i32) {
    %c0_i32 = arith.constant 0 : i32
    %c0_i32_0 = arith.constant 0 : i32
    %c0_i32_1 = arith.constant 0 : i32
    return %arg0, %c0_i32, %c0_i32_0 : i32, i32, i32
  }
  func.func @transform_1(%arg0: i32) -> (i32, i32) {
    %c0_i32 = arith.constant 0 : i32
    %c0_i32_0 = arith.constant 0 : i32
    %c0_i32_1 = arith.constant 0 : i32
    return %c0_i32, %c0_i32_0 : i32, i32
  }
  func.func @transform_2(%arg0: i32) -> (i32, i32) {
    %c0_i32 = arith.constant 0 : i32
    %c0_i32_0 = arith.constant 0 : i32
    %c0_i32_1 = arith.constant 0 : i32
    return %c0_i32, %c0_i32_0 : i32, i32
  }
  func.func @transform_3(%arg0: i32) -> (i32, i32) {
    %c0_i32 = arith.constant 0 : i32
    %c0_i32_0 = arith.constant 0 : i32
    %c0_i32_1 = arith.constant 0 : i32
    return %c0_i32, %c0_i32_0 : i32, i32
  }
  func.func @transform_4(%arg0: i32) -> (i32, i32) {
    %c0_i32 = arith.constant 0 : i32
    %c0_i32_0 = arith.constant 0 : i32
    %c0_i32_1 = arith.constant 0 : i32
    return %c0_i32, %c0_i32_0 : i32, i32
  }
  func.func @transform_5(%arg0: i32) -> (i32, i32) {
    %c0_i32 = arith.constant 0 : i32
    %c0_i32_0 = arith.constant 0 : i32
    %c0_i32_1 = arith.constant 0 : i32
    return %c0_i32, %c0_i32_0 : i32, i32
  }
  func.func @transform_6(%arg0: i32) -> (i32, i32) {
    %c0_i32 = arith.constant 0 : i32
    %c0_i32_0 = arith.constant 0 : i32
    %c0_i32_1 = arith.constant 0 : i32
    return %c0_i32, %c0_i32_0 : i32, i32
  }
  func.func @transform_7(%arg0: i32) -> (i32, i32) {
    %c0_i32 = arith.constant 0 : i32
    %c0_i32_0 = arith.constant 0 : i32
    %c0_i32_1 = arith.constant 0 : i32
    return %c0_i32, %c0_i32_0 : i32, i32
  }
  func.func @transform_8(%arg0: i32) -> (i32, i32) {
    %c0_i32 = arith.constant 0 : i32
    %c0_i32_0 = arith.constant 0 : i32
    %c0_i32_1 = arith.constant 0 : i32
    return %c0_i32, %c0_i32_0 : i32, i32
  }
  func.func @transform_9(%arg0: i32) -> (i32, i32) {
    %c0_i32 = arith.constant 0 : i32
    %c0_i32_0 = arith.constant 0 : i32
    %c0_i32_1 = arith.constant 0 : i32
    return %c0_i32, %c0_i32_0 : i32, i32
  }
  func.func @transform_10(%arg0: i32) -> (i32, i32) {
    %c0_i32 = arith.constant 0 : i32
    %c0_i32_0 = arith.constant 0 : i32
    %c0_i32_1 = arith.constant 0 : i32
    return %c0_i32, %c0_i32_0 : i32, i32
  }
  func.func @transform_11(%arg0: i32) -> (i32, i32) {
    %c0_i32 = arith.constant 0 : i32
    %c0_i32_0 = arith.constant 0 : i32
    %c0_i32_1 = arith.constant 0 : i32
    return %c0_i32, %c0_i32_0 : i32, i32
  }
  func.func @transform_12(%arg0: i32) -> (i32, i32) {
    %c0_i32 = arith.constant 0 : i32
    %c0_i32_0 = arith.constant 0 : i32
    %c0_i32_1 = arith.constant 0 : i32
    return %c0_i32, %c0_i32_0 : i32, i32
  }
  func.func @transform_13(%arg0: i32) -> (i32, i32) {
    %c0_i32 = arith.constant 0 : i32
    %c0_i32_0 = arith.constant 0 : i32
    %c0_i32_1 = arith.constant 0 : i32
    return %c0_i32, %c0_i32_0 : i32, i32
  }
  func.func @transform_14(%arg0: i32) -> (i32, i32) {
    %c0_i32 = arith.constant 0 : i32
    %c0_i32_0 = arith.constant 0 : i32
    %c0_i32_1 = arith.constant 0 : i32
    return %c0_i32, %c0_i32_0 : i32, i32
  }
  func.func @transform_15(%arg0: i32) -> (i32, i32, i32) {
    %c0_i32 = arith.constant 0 : i32
    %c0_i32_0 = arith.constant 0 : i32
    %c0_i32_1 = arith.constant 0 : i32
    return %arg0, %c0_i32, %c0_i32_0 : i32, i32, i32
  }
}

</mosaic_0001>

<llo_original>
// kernel: transformer_decoder_layer_ga.1
$region0: #{transformer_decoder_layer_ga.1}
  #allocation0 [shape = 'u32[]', space=smem, size = 0x4, offset = 0x4, fixed_abs, tag = 'smem constant byte address 0x4 - core index']
  #allocation1 [shape = 'u32[72,128]{1,0:T(1,128)}', space=vmem, size = 0x9000, scoped, tag = 'internal scratch']
  %s0 = inlined_call_operand.vmem [shape: f32[2,8,8], index: 0, kind: input, shape index: {}]
  %s1 = inlined_call_operand.vmem [shape: f32[1,8], index: 1, kind: input, shape index: {}]
  %s2 = inlined_call_operand.vmem [shape: f32[1,8], index: 2, kind: input, shape index: {}]
  %s3 = inlined_call_operand.vmem [shape: f32[8,8], index: 3, kind: input, shape index: {}]
  %s4 = inlined_call_operand.vmem [shape: f32[1,8], index: 4, kind: input, shape index: {}]
  %s5 = inlined_call_operand.hbm [shape: f32[1,8], index: 5, kind: input, shape index: {}]
  %s6 = inlined_call_operand.hbm [shape: f32[1,8], index: 6, kind: input, shape index: {}]
  %s7 = inlined_call_operand.vmem [shape: f32[8,8], index: 7, kind: input, shape index: {}]
  %s8 = inlined_call_operand.hbm [shape: f32[1,8], index: 8, kind: input, shape index: {}]
  %s9 = inlined_call_operand.vmem [shape: f32[8,32], index: 9, kind: input, shape index: {}]
  %s10 = inlined_call_operand.hbm [shape: f32[1,32], index: 10, kind: input, shape index: {}]
  %s11 = inlined_call_operand.vmem [shape: f32[32,8], index: 11, kind: input, shape index: {}]
  %s12 = inlined_call_operand.hbm [shape: f32[1,8], index: 12, kind: input, shape index: {}]
  %s13 = inlined_call_operand.hbm [shape: f32[1,8], index: 13, kind: input, shape index: {}]
  %s14 = inlined_call_operand.hbm [shape: f32[1,8], index: 14, kind: input, shape index: {}]
  %s15 = inlined_call_operand.hbm [shape: f32[2,8,8], index: 15, kind: output, shape index: {}]
  %s16 = sld [smem:[#allocation0]]
  $region121: #{transformer_decoder_layer_ga.1} parent=0
    _
  %s18 = ssub.s32 1, %s16
  %s19 = scalar_select 0, %s18, %s16
  $region1: #{transformer_decoder_layer_ga.1} parent=0
    #allocation2 [shape = 'u8[512]{0}', space=vmem, size = 0x400, scoped, tag = 'input window, operand 5, single buffered']
    #allocation3 [shape = 's32[2]{0}', space=sflag, size = 0x8, scoped, tag = 'scoped memory for transformer_decoder_layer_ga.1']
    #allocation4 [shape = 's32[2]{0}', space=sflag, size = 0x8, scoped, tag = 'scoped memory for transformer_decoder_layer_ga.1']
    #allocation5 [shape = 'u8[512]{0}', space=vmem, size = 0x400, scoped, tag = 'input window, operand 6, single buffered']
    #allocation6 [shape = 's32[1]{0}', space=sflag, size = 0x4, scoped, tag = 'scoped memory for transformer_decoder_layer_ga.1']
    #allocation7 [shape = 'u8[512]{0}', space=vmem, size = 0x400, scoped, tag = 'input window, operand 8, single buffered']
    #allocation8 [shape = 'u8[512]{0}', space=vmem, size = 0x400, scoped, tag = 'input window, operand 10, single buffered']
    #allocation9 [shape = 's32[1]{0}', space=sflag, size = 0x4, scoped, tag = 'scoped memory for transformer_decoder_layer_ga.1']
    #allocation10 [shape = 'u8[512]{0}', space=vmem, size = 0x400, scoped, tag = 'input window, operand 12, single buffered']
    #allocation11 [shape = 'u8[512]{0}', space=vmem, size = 0x400, scoped, tag = 'input window, operand 13, single buffered']
    #allocation12 [shape = 's32[1]{0}', space=sflag, size = 0x4, scoped, tag = 'scoped memory for transformer_decoder_layer_ga.1']
    #allocation13 [shape = 'u8[512]{0}', space=vmem, size = 0x400, scoped, tag = 'input window, operand 14, single buffered']
    #allocation14 [shape = 'u8[8192]{0}', space=vmem, size = 0x2000, scoped, tag = 'output window, operand 0']
    %20 = vsyncpa [#allocation3], 0
    %21 = vsyncpa [#allocation6], 0
    %22 = vsyncpa [#allocation9], 0
    %23 = vsyncpa [#allocation12], 0
    %24 = vsyncpa [#allocation4], 0
    %s25 = scalar_lea.sflag [#allocation4], 1
    %26 = vsyncpa %s25, 0
    loop: start=0, step=1, limit=4
    $region2: #{transformer_decoder_layer_ga.1} parent=1 // loop_pre_header
      _
    $region3: #{transformer_decoder_layer_ga.1} parent=1 // loop_header
      %s28 = sphi 0, %s32
      %p29 = scmp.ge.s32.totalorder %s28, 4
      %s38 = sphi 0, %s40
      %s41 = sphi 0, %s38
      %s42 = sphi 0, %s41
      %s58 = sphi 0, %s42
      %s62 = sphi 0, %s62
      %s64 = sphi 0, %s62
      %s65 = sphi 0, %s64
      %s79 = sphi 0, %s65
      %s83 = sphi 0, %s83
      %s85 = sphi 0, %s83
      %s86 = sphi 0, %s85
      %s100 = sphi 0, %s86
      %s104 = sphi 0, %s104
      %s106 = sphi 0, %s104
      %s107 = sphi 0, %s106
      %s121 = sphi 0, %s107
      %s125 = sphi 0, %s125
      %s127 = sphi 0, %s125
      %s128 = sphi 0, %s127
      %s142 = sphi 0, %s128
      %s146 = sphi 0, %s146
      %s148 = sphi 0, %s146
      %s149 = sphi 0, %s148
      %s163 = sphi 0, %s149
      %s167 = sphi 0, %s167
      %s169 = sphi 0, %s167
      %s170 = sphi 0, %s169
      %s184 = sphi 0, %s170
      %s188 = sphi 0, %s188
      %s190 = sphi 0, %s188
      %s191 = sphi 0, %s190
      %s205 = sphi 0, %s191
      %s209 = sphi 0, %s209
      %s211 = sphi 0, %s209
      %s212 = sphi 0, %s211
      %s226 = sphi 0, %s212
      %s230 = sphi 0, %s230
      %s232 = sphi 0, %s230
      %s233 = sphi 0, %s232
      %s247 = sphi 0, %s233
      %s251 = sphi 0, %s251
      %s253 = sphi 0, %s251
      %s254 = sphi 0, %s253
      %s268 = sphi 0, %s254
      %s272 = sphi 0, %s272
      %s274 = sphi 0, %s272
      %s275 = sphi 0, %s274
      %s289 = sphi 0, %s275
      %s293 = sphi 0, %s293
      %s295 = sphi 0, %s293
      %s296 = sphi 0, %s295
      %s310 = sphi 0, %s296
      %s314 = sphi 0, %s314
      %s316 = sphi 0, %s314
      %s317 = sphi 0, %s316
      %s331 = sphi 0, %s317
      %s335 = sphi 0, %s335
      %s337 = sphi 0, %s335
      %s338 = sphi 0, %s337
      %s352 = sphi 0, %s338
      %s358 = sphi 0, %s360
      %s361 = sphi 0, %s358
      %s362 = sphi 0, %s361
      %s378 = sphi 0, %s362
    $region4: #{transformer_decoder_layer_ga.1} parent=1 // loop_header_branch
      %31 = sbr.rel (%p29) target = $region8
    $region5: #{transformer_decoder_layer_ga.1} parent=1 // loop_body
      %s33 = ssub.s32 %s28, 1
      %s34 = ssub.s32 %s28, 2
      %s35 = sadd.s32 %s28, 1
      %s36 = ssub.s32 %s28, %s35
      %p37 = scmp.eq.s32.totalorder %s36, 0
      %s39 = sadd.s32 %s38, 1
      %s40 = scalar_select %p37, %s38, %s39
      %p43 = pneg %p37
      %p44 = scmp.eq.s32.totalorder %s28, 1
      %p45 = por %p43, %p44
      %p46 = scmp.ne.s32.totalorder %s38, %s41
      %p47 = scmp.eq.s32.totalorder %s28, 0
      %p48 = por %p46, %p47
      %p49 = scmp.ne.s32.totalorder %s38, %s41
      %p50 = scmp.eq.s32.totalorder %s33, 1
      %p51 = por %p49, %p50
      %p52 = scmp.ne.s32.totalorder %s41, %s42
      %p53 = scmp.eq.s32.totalorder %s33, 0
      %p54 = por %p52, %p53
      %p55 = scmp.ne.s32.totalorder %s41, %s42
      %p56 = scmp.eq.s32.totalorder %s34, 1
      %p57 = por %p55, %p56
      %p59 = scmp.ne.s32.totalorder %s42, %s58
      %p60 = scmp.eq.s32.totalorder %s34, 0
      %p61 = por %p59, %p60
      %s63 = sadd.s32 %s62, 1
      %p66 = scmp.eq.s32.totalorder %s28, 1
      %p67 = scmp.ne.s32.totalorder %s62, %s64
      %p68 = scmp.eq.s32.totalorder %s28, 0
      %p69 = por %p67, %p68
      %p70 = scmp.ne.s32.totalorder %s62, %s64
      %p71 = scmp.eq.s32.totalorder %s33, 1
      %p72 = por %p70, %p71
      %p73 = scmp.ne.s32.totalorder %s64, %s65
      %p74 = scmp.eq.s32.totalorder %s33, 0
      %p75 = por %p73, %p74
      %p76 = scmp.ne.s32.totalorder %s64, %s65
      %p77 = scmp.eq.s32.totalorder %s34, 1
      %p78 = por %p76, %p77
      %p80 = scmp.ne.s32.totalorder %s65, %s79
      %p81 = scmp.eq.s32.totalorder %s34, 0
      %p82 = por %p80, %p81
      %s84 = sadd.s32 %s83, 1
      %p87 = scmp.eq.s32.totalorder %s28, 1
      %p88 = scmp.ne.s32.totalorder %s83, %s85
      %p89 = scmp.eq.s32.totalorder %s28, 0
      %p90 = por %p88, %p89
      %p91 = scmp.ne.s32.totalorder %s83, %s85
      %p92 = scmp.eq.s32.totalorder %s33, 1
      %p93 = por %p91, %p92
      %p94 = scmp.ne.s32.totalorder %s85, %s86
      %p95 = scmp.eq.s32.totalorder %s33, 0
      %p96 = por %p94, %p95
      %p97 = scmp.ne.s32.totalorder %s85, %s86
      %p98 = scmp.eq.s32.totalorder %s34, 1
      %p99 = por %p97, %p98
      %p101 = scmp.ne.s32.totalorder %s86, %s100
      %p102 = scmp.eq.s32.totalorder %s34, 0
      %p103 = por %p101, %p102
      %s105 = sadd.s32 %s104, 1
      %p108 = scmp.eq.s32.totalorder %s28, 1
      %p109 = scmp.ne.s32.totalorder %s104, %s106
      %p110 = scmp.eq.s32.totalorder %s28, 0
      %p111 = por %p109, %p110
      %p112 = scmp.ne.s32.totalorder %s104, %s106
      %p113 = scmp.eq.s32.totalorder %s33, 1
      %p114 = por %p112, %p113
      %p115 = scmp.ne.s32.totalorder %s106, %s107
      %p116 = scmp.eq.s32.totalorder %s33, 0
      %p117 = por %p115, %p116
      %p118 = scmp.ne.s32.totalorder %s106, %s107
      %p119 = scmp.eq.s32.totalorder %s34, 1
      %p120 = por %p118, %p119
      %p122 = scmp.ne.s32.totalorder %s107, %s121
      %p123 = scmp.eq.s32.totalorder %s34, 0
      %p124 = por %p122, %p123
      %s126 = sadd.s32 %s125, 1
      %p129 = scmp.eq.s32.totalorder %s28, 1
      %p130 = scmp.ne.s32.totalorder %s125, %s127
      %p131 = scmp.eq.s32.totalorder %s28, 0
      %p132 = por %p130, %p131
      %p133 = scmp.ne.s32.totalorder %s125, %s127
      %p134 = scmp.eq.s32.totalorder %s33, 1
      %p135 = por %p133, %p134
      %p136 = scmp.ne.s32.totalorder %s127, %s128
      %p137 = scmp.eq.s32.totalorder %s33, 0
      %p138 = por %p136, %p137
      %p139 = scmp.ne.s32.totalorder %s127, %s128
      %p140 = scmp.eq.s32.totalorder %s34, 1
      %p141 = por %p139, %p140
      %p143 = scmp.ne.s32.totalorder %s128, %s142
      %p144 = scmp.eq.s32.totalorder %s34, 0
      %p145 = por %p143, %p144
      %s147 = sadd.s32 %s146, 1
      %p150 = scmp.eq.s32.totalorder %s28, 1
      %p151 = scmp.ne.s32.totalorder %s146, %s148
      %p152 = scmp.eq.s32.totalorder %s28, 0
      %p153 = por %p151, %p152
      %p154 = scmp.ne.s32.totalorder %s146, %s148
      %p155 = scmp.eq.s32.totalorder %s33, 1
      %p156 = por %p154, %p155
      %p157 = scmp.ne.s32.totalorder %s148, %s149
      %p158 = scmp.eq.s32.totalorder %s33, 0
      %p159 = por %p157, %p158
      %p160 = scmp.ne.s32.totalorder %s148, %s149
      %p161 = scmp.eq.s32.totalorder %s34, 1
      %p162 = por %p160, %p161
      %p164 = scmp.ne.s32.totalorder %s149, %s163
      %p165 = scmp.eq.s32.totalorder %s34, 0
      %p166 = por %p164, %p165
      %s168 = sadd.s32 %s167, 1
      %p171 = scmp.eq.s32.totalorder %s28, 1
      %p172 = scmp.ne.s32.totalorder %s167, %s169
      %p173 = scmp.eq.s32.totalorder %s28, 0
      %p174 = por %p172, %p173
      %p175 = scmp.ne.s32.totalorder %s167, %s169
      %p176 = scmp.eq.s32.totalorder %s33, 1
      %p177 = por %p175, %p176
      %p178 = scmp.ne.s32.totalorder %s169, %s170
      %p179 = scmp.eq.s32.totalorder %s33, 0
      %p180 = por %p178, %p179
      %p181 = scmp.ne.s32.totalorder %s169, %s170
      %p182 = scmp.eq.s32.totalorder %s34, 1
      %p183 = por %p181, %p182
      %p185 = scmp.ne.s32.totalorder %s170, %s184
      %p186 = scmp.eq.s32.totalorder %s34, 0
      %p187 = por %p185, %p186
      %s189 = sadd.s32 %s188, 1
      %p192 = scmp.eq.s32.totalorder %s28, 1
      %p193 = scmp.ne.s32.totalorder %s188, %s190
      %p194 = scmp.eq.s32.totalorder %s28, 0
      %p195 = por %p193, %p194
      %p196 = scmp.ne.s32.totalorder %s188, %s190
      %p197 = scmp.eq.s32.totalorder %s33, 1
      %p198 = por %p196, %p197
      %p199 = scmp.ne.s32.totalorder %s190, %s191
      %p200 = scmp.eq.s32.totalorder %s33, 0
      %p201 = por %p199, %p200
      %p202 = scmp.ne.s32.totalorder %s190, %s191
      %p203 = scmp.eq.s32.totalorder %s34, 1
      %p204 = por %p202, %p203
      %p206 = scmp.ne.s32.totalorder %s191, %s205
      %p207 = scmp.eq.s32.totalorder %s34, 0
      %p208 = por %p206, %p207
      %s210 = sadd.s32 %s209, 1
      %p213 = scmp.eq.s32.totalorder %s28, 1
      %p214 = scmp.ne.s32.totalorder %s209, %s211
      %p215 = scmp.eq.s32.totalorder %s28, 0
      %p216 = por %p214, %p215
      %p217 = scmp.ne.s32.totalorder %s209, %s211
      %p218 = scmp.eq.s32.totalorder %s33, 1
      %p219 = por %p217, %p218
      %p220 = scmp.ne.s32.totalorder %s211, %s212
      %p221 = scmp.eq.s32.totalorder %s33, 0
      %p222 = por %p220, %p221
      %p223 = scmp.ne.s32.totalorder %s211, %s212
      %p224 = scmp.eq.s32.totalorder %s34, 1
      %p225 = por %p223, %p224
      %p227 = scmp.ne.s32.totalorder %s212, %s226
      %p228 = scmp.eq.s32.totalorder %s34, 0
      %p229 = por %p227, %p228
      %s231 = sadd.s32 %s230, 1
      %p234 = scmp.eq.s32.totalorder %s28, 1
      %p235 = scmp.ne.s32.totalorder %s230, %s232
      %p236 = scmp.eq.s32.totalorder %s28, 0
      %p237 = por %p235, %p236
      %p238 = scmp.ne.s32.totalorder %s230, %s232
      %p239 = scmp.eq.s32.totalorder %s33, 1
      %p240 = por %p238, %p239
      %p241 = scmp.ne.s32.totalorder %s232, %s233
      %p242 = scmp.eq.s32.totalorder %s33, 0
      %p243 = por %p241, %p242
      %p244 = scmp.ne.s32.totalorder %s232, %s233
      %p245 = scmp.eq.s32.totalorder %s34, 1
      %p246 = por %p244, %p245
      %p248 = scmp.ne.s32.totalorder %s233, %s247
      %p249 = scmp.eq.s32.totalorder %s34, 0
      %p250 = por %p248, %p249
      %s252 = sadd.s32 %s251, 1
      %p255 = scmp.eq.s32.totalorder %s28, 1
      %p256 = scmp.ne.s32.totalorder %s251, %s253
      %p257 = scmp.eq.s32.totalorder %s28, 0
      %p258 = por %p256, %p257
      %p259 = scmp.ne.s32.totalorder %s251, %s253
      %p260 = scmp.eq.s32.totalorder %s33, 1
      %p261 = por %p259, %p260
      %p262 = scmp.ne.s32.totalorder %s253, %s254
      %p263 = scmp.eq.s32.totalorder %s33, 0
      %p264 = por %p262, %p263
      %p265 = scmp.ne.s32.totalorder %s253, %s254
      %p266 = scmp.eq.s32.totalorder %s34, 1
      %p267 = por %p265, %p266
      %p269 = scmp.ne.s32.totalorder %s254, %s268
      %p270 = scmp.eq.s32.totalorder %s34, 0
      %p271 = por %p269, %p270
      %s273 = sadd.s32 %s272, 1
      %p276 = scmp.eq.s32.totalorder %s28, 1
      %p277 = scmp.ne.s32.totalorder %s272, %s274
      %p278 = scmp.eq.s32.totalorder %s28, 0
      %p279 = por %p277, %p278
      %p280 = scmp.ne.s32.totalorder %s272, %s274
      %p281 = scmp.eq.s32.totalorder %s33, 1
      %p282 = por %p280, %p281
      %p283 = scmp.ne.s32.totalorder %s274, %s275
      %p284 = scmp.eq.s32.totalorder %s33, 0
      %p285 = por %p283, %p284
      %p286 = scmp.ne.s32.totalorder %s274, %s275
      %p287 = scmp.eq.s32.totalorder %s34, 1
      %p288 = por %p286, %p287
      %p290 = scmp.ne.s32.totalorder %s275, %s289
      %p291 = scmp.eq.s32.totalorder %s34, 0
      %p292 = por %p290, %p291
      %s294 = sadd.s32 %s293, 1
      %p297 = scmp.eq.s32.totalorder %s28, 1
      %p298 = scmp.ne.s32.totalorder %s293, %s295
      %p299 = scmp.eq.s32.totalorder %s28, 0
      %p300 = por %p298, %p299
      %p301 = scmp.ne.s32.totalorder %s293, %s295
      %p302 = scmp.eq.s32.totalorder %s33, 1
      %p303 = por %p301, %p302
      %p304 = scmp.ne.s32.totalorder %s295, %s296
      %p305 = scmp.eq.s32.totalorder %s33, 0
      %p306 = por %p304, %p305
      %p307 = scmp.ne.s32.totalorder %s295, %s296
      %p308 = scmp.eq.s32.totalorder %s34, 1
      %p309 = por %p307, %p308
      %p311 = scmp.ne.s32.totalorder %s296, %s310
      %p312 = scmp.eq.s32.totalorder %s34, 0
      %p313 = por %p311, %p312
      %s315 = sadd.s32 %s314, 1
      %p318 = scmp.eq.s32.totalorder %s28, 1
      %p319 = scmp.ne.s32.totalorder %s314, %s316
      %p320 = scmp.eq.s32.totalorder %s28, 0
      %p321 = por %p319, %p320
      %p322 = scmp.ne.s32.totalorder %s314, %s316
      %p323 = scmp.eq.s32.totalorder %s33, 1
      %p324 = por %p322, %p323
      %p325 = scmp.ne.s32.totalorder %s316, %s317
      %p326 = scmp.eq.s32.totalorder %s33, 0
      %p327 = por %p325, %p326
      %p328 = scmp.ne.s32.totalorder %s316, %s317
      %p329 = scmp.eq.s32.totalorder %s34, 1
      %p330 = por %p328, %p329
      %p332 = scmp.ne.s32.totalorder %s317, %s331
      %p333 = scmp.eq.s32.totalorder %s34, 0
      %p334 = por %p332, %p333
      %s336 = sadd.s32 %s335, 1
      %p339 = scmp.eq.s32.totalorder %s28, 1
      %p340 = scmp.ne.s32.totalorder %s335, %s337
      %p341 = scmp.eq.s32.totalorder %s28, 0
      %p342 = por %p340, %p341
      %p343 = scmp.ne.s32.totalorder %s335, %s337
      %p344 = scmp.eq.s32.totalorder %s33, 1
      %p345 = por %p343, %p344
      %p346 = scmp.ne.s32.totalorder %s337, %s338
      %p347 = scmp.eq.s32.totalorder %s33, 0
      %p348 = por %p346, %p347
      %p349 = scmp.ne.s32.totalorder %s337, %s338
      %p350 = scmp.eq.s32.totalorder %s34, 1
      %p351 = por %p349, %p350
      %p353 = scmp.ne.s32.totalorder %s338, %s352
      %p354 = scmp.eq.s32.totalorder %s34, 0
      %p355 = por %p353, %p354
      %s356 = ssub.s32 %s28, %s35
      %p357 = scmp.eq.s32.totalorder %s356, 0
      %s359 = sadd.s32 %s358, 1
      %s360 = scalar_select %p357, %s358, %s359
      %p363 = pneg %p357
      %p364 = scmp.eq.s32.totalorder %s28, 1
      %p365 = por %p363, %p364
      %p366 = scmp.ne.s32.totalorder %s358, %s361
      %p367 = scmp.eq.s32.totalorder %s28, 0
      %p368 = por %p366, %p367
      %p369 = scmp.ne.s32.totalorder %s358, %s361
      %p370 = scmp.eq.s32.totalorder %s33, 1
      %p371 = por %p369, %p370
      %p372 = scmp.ne.s32.totalorder %s361, %s362
      %p373 = scmp.eq.s32.totalorder %s33, 0
      %p374 = por %p372, %p373
      %p375 = scmp.ne.s32.totalorder %s361, %s362
      %p376 = scmp.eq.s32.totalorder %s34, 1
      %p377 = por %p375, %p376
      %p379 = scmp.ne.s32.totalorder %s362, %s378
      %p380 = scmp.eq.s32.totalorder %s34, 0
      %p381 = por %p379, %p380
      %p382 = scmp.le.s32.totalorder 1, %s28
      %p383 = scmp.lt.s32.totalorder %s28, 3
      %p384 = pnand %p382, %p383
      %p385 = pneg %p384
      // Predicated region
      $region9: #{transformer_decoder_layer_ga.1} parent=5 // pred_check
        _
      $region10: #{transformer_decoder_layer_ga.1} parent=5 // pred_check_branch
        %387 = sbr.rel (%p384) target = $region12
      $region11: #{transformer_decoder_layer_ga.1} parent=5 // pred_region
        %s388 = ssub.s32 %s28, 1
        // Predicated region
        $region13: #{transformer_decoder_layer_ga.1} parent=11 // pred_check
          %p389 = pneg %p75
        $region14: #{transformer_decoder_layer_ga.1} parent=11 // pred_check_branch
          %391 = sbr.rel (%p389) target = $region16
        $region15: #{transformer_decoder_layer_ga.1} parent=11 // pred_region
          _
        $region16: #{transformer_decoder_layer_ga.1} parent=11 // pred_fallthru
          _
        // Predicated region
        $region17: #{transformer_decoder_layer_ga.1} parent=11 // pred_check
          %p392 = pneg %p96
        $region18: #{transformer_decoder_layer_ga.1} parent=11 // pred_check_branch
          %394 = sbr.rel (%p392) target = $region20
        $region19: #{transformer_decoder_layer_ga.1} parent=11 // pred_region
          _
        $region20: #{transformer_decoder_layer_ga.1} parent=11 // pred_fallthru
          _
        // Predicated region
        $region21: #{transformer_decoder_layer_ga.1} parent=11 // pred_check
          %p395 = pneg %p117
        $region22: #{transformer_decoder_layer_ga.1} parent=11 // pred_check_branch
          %397 = sbr.rel (%p395) target = $region24
        $region23: #{transformer_decoder_layer_ga.1} parent=11 // pred_region
          _
        $region24: #{transformer_decoder_layer_ga.1} parent=11 // pred_fallthru
          _
        // Predicated region
        $region25: #{transformer_decoder_layer_ga.1} parent=11 // pred_check
          %p398 = pneg %p138
        $region26: #{transformer_decoder_layer_ga.1} parent=11 // pred_check_branch
          %400 = sbr.rel (%p398) target = $region28
        $region27: #{transformer_decoder_layer_ga.1} parent=11 // pred_region
          _
        $region28: #{transformer_decoder_layer_ga.1} parent=11 // pred_fallthru
          _
        // Predicated region
        $region29: #{transformer_decoder_layer_ga.1} parent=11 // pred_check
          %p401 = pneg %p159
        $region30: #{transformer_decoder_layer_ga.1} parent=11 // pred_check_branch
          %403 = sbr.rel (%p401) target = $region32
        $region31: #{transformer_decoder_layer_ga.1} parent=11 // pred_region
          %405 = vsyncadd [#allocation3], 0
          %s407 = sshll.u32 %s5, 4
          %s408 = int_to_ptr.hbm [resolvable:$true] %s407
          %s409 = sshll.u32 [#allocation2], 4
          %s410 = int_to_ptr.vmem [resolvable:$true] %s409
          %412 = dma.hbm_to_vmem [thread:$0]  %s408, 16, %s410, [#allocation3]
        $region32: #{transformer_decoder_layer_ga.1} parent=11 // pred_fallthru
          _
        // Predicated region
        $region33: #{transformer_decoder_layer_ga.1} parent=11 // pred_check
          %p413 = pneg %p180
        $region34: #{transformer_decoder_layer_ga.1} parent=11 // pred_check_branch
          %415 = sbr.rel (%p413) target = $region36
        $region35: #{transformer_decoder_layer_ga.1} parent=11 // pred_region
          %417 = vsyncadd [#allocation6], 0
          %s419 = sshll.u32 %s6, 4
          %s420 = int_to_ptr.hbm [resolvable:$true] %s419
          %s421 = sshll.u32 [#allocation5], 4
          %s422 = int_to_ptr.vmem [resolvable:$true] %s421
          %424 = dma.hbm_to_vmem [thread:$0]  %s420, 16, %s422, [#allocation6]
        $region36: #{transformer_decoder_layer_ga.1} parent=11 // pred_fallthru
          _
        // Predicated region
        $region37: #{transformer_decoder_layer_ga.1} parent=11 // pred_check
          %p425 = pneg %p201
        $region38: #{transformer_decoder_layer_ga.1} parent=11 // pred_check_branch
          %427 = sbr.rel (%p425) target = $region40
        $region39: #{transformer_decoder_layer_ga.1} parent=11 // pred_region
          _
        $region40: #{transformer_decoder_layer_ga.1} parent=11 // pred_fallthru
          _
        // Predicated region
        $region41: #{transformer_decoder_layer_ga.1} parent=11 // pred_check
          %p428 = pneg %p222
        $region42: #{transformer_decoder_layer_ga.1} parent=11 // pred_check_branch
          %430 = sbr.rel (%p428) target = $region44
        $region43: #{transformer_decoder_layer_ga.1} parent=11 // pred_region
          %432 = vsyncadd [#allocation6], 0
          %s434 = sshll.u32 %s8, 4
          %s435 = int_to_ptr.hbm [resolvable:$true] %s434
          %s436 = sshll.u32 [#allocation7], 4
          %s437 = int_to_ptr.vmem [resolvable:$true] %s436
          %439 = dma.hbm_to_vmem [thread:$0]  %s435, 16, %s437, [#allocation6]
        $region44: #{transformer_decoder_layer_ga.1} parent=11 // pred_fallthru
          _
        // Predicated region
        $region45: #{transformer_decoder_layer_ga.1} parent=11 // pred_check
          %p440 = pneg %p243
        $region46: #{transformer_decoder_layer_ga.1} parent=11 // pred_check_branch
          %442 = sbr.rel (%p440) target = $region48
        $region47: #{transformer_decoder_layer_ga.1} parent=11 // pred_region
          _
        $region48: #{transformer_decoder_layer_ga.1} parent=11 // pred_fallthru
          _
        // Predicated region
        $region49: #{transformer_decoder_layer_ga.1} parent=11 // pred_check
          %p443 = pneg %p264
        $region50: #{transformer_decoder_layer_ga.1} parent=11 // pred_check_branch
          %445 = sbr.rel (%p443) target = $region52
        $region51: #{transformer_decoder_layer_ga.1} parent=11 // pred_region
          %447 = vsyncadd [#allocation9], 0
          %s449 = sshll.u32 %s10, 4
          %s450 = int_to_ptr.hbm [resolvable:$true] %s449
          %s451 = sshll.u32 [#allocation8], 4
          %s452 = int_to_ptr.vmem [resolvable:$true] %s451
          %454 = dma.hbm_to_vmem [thread:$0]  %s450, 16, %s452, [#allocation9]
        $region52: #{transformer_decoder_layer_ga.1} parent=11 // pred_fallthru
          _
        // Predicated region
        $region53: #{transformer_decoder_layer_ga.1} parent=11 // pred_check
          %p455 = pneg %p285
        $region54: #{transformer_decoder_layer_ga.1} parent=11 // pred_check_branch
          %457 = sbr.rel (%p455) target = $region56
        $region55: #{transformer_decoder_layer_ga.1} parent=11 // pred_region
          _
        $region56: #{transformer_decoder_layer_ga.1} parent=11 // pred_fallthru
          _
        // Predicated region
        $region57: #{transformer_decoder_layer_ga.1} parent=11 // pred_check
          %p458 = pneg %p306
        $region58: #{transformer_decoder_layer_ga.1} parent=11 // pred_check_branch
          %460 = sbr.rel (%p458) target = $region60
        $region59: #{transformer_decoder_layer_ga.1} parent=11 // pred_region
          %462 = vsyncadd [#allocation9], 0
          %s464 = sshll.u32 %s12, 4
          %s465 = int_to_ptr.hbm [resolvable:$true] %s464
          %s466 = sshll.u32 [#allocation10], 4
          %s467 = int_to_ptr.vmem [resolvable:$true] %s466
          %469 = dma.hbm_to_vmem [thread:$0]  %s465, 16, %s467, [#allocation9]
        $region60: #{transformer_decoder_layer_ga.1} parent=11 // pred_fallthru
          _
        // Predicated region
        $region61: #{transformer_decoder_layer_ga.1} parent=11 // pred_check
          %p470 = pneg %p327
        $region62: #{transformer_decoder_layer_ga.1} parent=11 // pred_check_branch
          %472 = sbr.rel (%p470) target = $region64
        $region63: #{transformer_decoder_layer_ga.1} parent=11 // pred_region
          %474 = vsyncadd [#allocation12], 0
          %s476 = sshll.u32 %s13, 4
          %s477 = int_to_ptr.hbm [resolvable:$true] %s476
          %s478 = sshll.u32 [#allocation11], 4
          %s479 = int_to_ptr.vmem [resolvable:$true] %s478
          %481 = dma.hbm_to_vmem [thread:$0]  %s477, 16, %s479, [#allocation12]
        $region64: #{transformer_decoder_layer_ga.1} parent=11 // pred_fallthru
          _
        // Predicated region
        $region65: #{transformer_decoder_layer_ga.1} parent=11 // pred_check
          %p482 = pneg %p348
        $region66: #{transformer_decoder_layer_ga.1} parent=11 // pred_check_branch
          %484 = sbr.rel (%p482) target = $region68
        $region67: #{transformer_decoder_layer_ga.1} parent=11 // pred_region
          %486 = vsyncadd [#allocation12], 0
          %s488 = sshll.u32 %s14, 4
          %s489 = int_to_ptr.hbm [resolvable:$true] %s488
          %s490 = sshll.u32 [#allocation13], 4
          %s491 = int_to_ptr.vmem [resolvable:$true] %s490
          %493 = dma.hbm_to_vmem [thread:$0]  %s489, 16, %s491, [#allocation12]
        $region68: #{transformer_decoder_layer_ga.1} parent=11 // pred_fallthru
          _
      $region12: #{transformer_decoder_layer_ga.1} parent=5 // pred_fallthru
        _
      %p494 = scmp.lt.s32.totalorder %s28, 2
      // Predicated region
      $region69: #{transformer_decoder_layer_ga.1} parent=5 // pred_check
        %p495 = pneg %p494
      $region70: #{transformer_decoder_layer_ga.1} parent=5 // pred_check_branch
        %497 = sbr.rel (%p495) target = $region72
      $region71: #{transformer_decoder_layer_ga.1} parent=5 // pred_region
        // Predicated region
        $region73: #{transformer_decoder_layer_ga.1} parent=71 // pred_check
          %p498 = pneg %p48
        $region74: #{transformer_decoder_layer_ga.1} parent=71 // pred_check_branch
          %500 = sbr.rel (%p498) target = $region76
        $region75: #{transformer_decoder_layer_ga.1} parent=71 // pred_region
          %p501 = scmp.lt.s32.totalorder %s28, 1
          %s502 = scalar_select %p501, %s28, 1
          %s503 = smul.addr %s502, 8
          %s504 = scalar_lea.vmem %s0, %s503
        $region76: #{transformer_decoder_layer_ga.1} parent=71 // pred_fallthru
          _
      $region72: #{transformer_decoder_layer_ga.1} parent=5 // pred_fallthru
        _
      %p505 = scmp.le.s32.totalorder 1, %s28
      %p506 = scmp.lt.s32.totalorder %s28, 3
      %p507 = pnand %p505, %p506
      %p508 = pneg %p507
      // Predicated region
      $region77: #{transformer_decoder_layer_ga.1} parent=5 // pred_check
        _
      $region78: #{transformer_decoder_layer_ga.1} parent=5 // pred_check_branch
        %510 = sbr.rel (%p507) target = $region80
      $region79: #{transformer_decoder_layer_ga.1} parent=5 // pred_region
        %s511 = ssub.s32 %s28, 1
        // Predicated region
        $region81: #{transformer_decoder_layer_ga.1} parent=79 // pred_check
          %p512 = pneg %p159
        $region82: #{transformer_decoder_layer_ga.1} parent=79 // pred_check_branch
          %514 = sbr.rel (%p512) target = $region84
        $region83: #{transformer_decoder_layer_ga.1} parent=79 // pred_region
          %516 = dma.done [#allocation3], 16
        $region84: #{transformer_decoder_layer_ga.1} parent=79 // pred_fallthru
          _
        // Predicated region
        $region85: #{transformer_decoder_layer_ga.1} parent=79 // pred_check
          %p517 = pneg %p180
        $region86: #{transformer_decoder_layer_ga.1} parent=79 // pred_check_branch
          %519 = sbr.rel (%p517) target = $region88
        $region87: #{transformer_decoder_layer_ga.1} parent=79 // pred_region
          %521 = dma.done [#allocation6], 16
        $region88: #{transformer_decoder_layer_ga.1} parent=79 // pred_fallthru
          _
        // Predicated region
        $region89: #{transformer_decoder_layer_ga.1} parent=79 // pred_check
          %p522 = pneg %p222
        $region90: #{transformer_decoder_layer_ga.1} parent=79 // pred_check_branch
          %524 = sbr.rel (%p522) target = $region92
        $region91: #{transformer_decoder_layer_ga.1} parent=79 // pred_region
          %526 = dma.done [#allocation6], 16
        $region92: #{transformer_decoder_layer_ga.1} parent=79 // pred_fallthru
          _
        // Predicated region
        $region93: #{transformer_decoder_layer_ga.1} parent=79 // pred_check
          %p527 = pneg %p264
        $region94: #{transformer_decoder_layer_ga.1} parent=79 // pred_check_branch
          %529 = sbr.rel (%p527) target = $region96
        $region95: #{transformer_decoder_layer_ga.1} parent=79 // pred_region
          %531 = dma.done [#allocation9], 16
        $region96: #{transformer_decoder_layer_ga.1} parent=79 // pred_fallthru
          _
        // Predicated region
        $region97: #{transformer_decoder_layer_ga.1} parent=79 // pred_check
          %p532 = pneg %p306
        $region98: #{transformer_decoder_layer_ga.1} parent=79 // pred_check_branch
          %534 = sbr.rel (%p532) target = $region100
        $region99: #{transformer_decoder_layer_ga.1} parent=79 // pred_region
          %536 = dma.done [#allocation9], 16
        $region100: #{transformer_decoder_layer_ga.1} parent=79 // pred_fallthru
          _
        // Predicated region
        $region101: #{transformer_decoder_layer_ga.1} parent=79 // pred_check
          %p537 = pneg %p327
        $region102: #{transformer_decoder_layer_ga.1} parent=79 // pred_check_branch
          %539 = sbr.rel (%p537) target = $region104
        $region103: #{transformer_decoder_layer_ga.1} parent=79 // pred_region
          %541 = dma.done [#allocation12], 16
        $region104: #{transformer_decoder_layer_ga.1} parent=79 // pred_fallthru
          _
        // Predicated region
        $region105: #{transformer_decoder_layer_ga.1} parent=79 // pred_check
          %p542 = pneg %p348
        $region106: #{transformer_decoder_layer_ga.1} parent=79 // pred_check_branch
          %544 = sbr.rel (%p542) target = $region108
        $region107: #{transformer_decoder_layer_ga.1} parent=79 // pred_region
          %546 = dma.done [#allocation12], 16
        $region108: #{transformer_decoder_layer_ga.1} parent=79 // pred_fallthru
          _
        %p547 = scmp.lt.s32.totalorder %s33, 1
        %s548 = scalar_select %p547, %s33, 1
        %s549 = smul.addr %s548, 8
        %s550 = scalar_lea.vmem %s0, %s549
        %p551 = pneg %p54
        %p552 = pneg %p51
        %p553 = pneg %p75
        %p554 = pneg %p72
        %p555 = pneg %p96
        %p556 = pneg %p93
        %p557 = pneg %p117
        %p558 = pneg %p114
        %p559 = pneg %p138
        %p560 = pneg %p135
        %p561 = pneg %p159
        %p562 = pneg %p156
        %p563 = pneg %p180
        %p564 = pneg %p177
        %p565 = pneg %p201
        %p566 = pneg %p198
        %p567 = pneg %p222
        %p568 = pneg %p219
        %p569 = pneg %p243
        %p570 = pneg %p240
        %p571 = pneg %p264
        %p572 = pneg %p261
        %p573 = pneg %p285
        %p574 = pneg %p282
        %p575 = pneg %p306
        %p576 = pneg %p303
        %p577 = pneg %p327
        %p578 = pneg %p324
        %p579 = pneg %p348
        %p580 = pneg %p345
        %p581 = pneg %p374
        %p582 = pneg %p371
        %s583 = sand.u32 %s361, 1
        %s584 = scalar_lea.sflag [#allocation4], %s583
        %s585 = sand.u32 %s361, 1
        %s586 = smul.addr %s585, 8
        %s587 = scalar_lea.vmem [#allocation14], %s586
        %p588 = scmp.lt.s32.totalorder %s33, 1
        %s589 = scalar_select %p588, %s33, 1
        %s590 = smul.addr %s589, 8
        %s591 = scalar_lea.vmem %s0, %s590
        %v592 = vld [vmem:[%s591] sm:$0xff]
        %v593 = vld [vmem:[%s1] sm:$0x1]
        %v594 = vld [vmem:[%s2] sm:$0x1]
        %vm595 = vcmask 64512
        %v596 = vsel %vm595, %v592, 0.0
        %597 = vadd.xlane.f32.xlu0 %v596
        %v598 = vpop.xlane.xlu0 %597
        %v599 = vrcp.pop 8.0
        %v600 = vmul.f32 8.0, %v599
        %v601 = vsub.f32 1.0, %v600
        %v602 = vmul.f32 %v599, %v601
        %v603 = vadd.f32 %v599, %v602
        %vm604 = vweird.f32 %v599
        %v605 = vsel %vm604, %v599, %v603
        %v606 = vmul.f32 %v598, %v605
        %v607 = vsub.f32 %v592, %v606
        %v608 = vmul.f32 %v607, %v607
        %v609 = vsel %vm595, %v608, 0.0
        %610 = vadd.xlane.f32.xlu0 %v609
        %v611 = vpop.xlane.xlu0 %610
        %v612 = vmul.f32 %v611, %v605
        %v613 = vadd.f32 %v612, 1e-05
        %v614 = vrsqrt.pop %v613
        %v615 = vmul.f32 %v614, %v613
        %v616 = vmul.f32 %v615, %v614
        %v617 = vmul.f32 0.5, %v616
        %v618 = vsub.f32 1.5, %v617
        %v619 = vmul.f32 %v614, %v618
        %vm620 = vweird.f32 %v613
        %vm621 = vweird.f32 %v614
        %vm622 = vmor %vm620, %vm621
        %v623 = vsel %vm622, %v614, %v619
        %v624 = vmul.f32 %v607, %v623
        %v626 = vperm.slane %v593, 0
        %v628 = vmul.f32 %v624, %v626
        %v630 = vperm.slane %v594, 0
        %v632 = vadd.f32 %v628, %v630
        %v633 = vsel %vm595, %v632, 0.0
        %v634 = vrot.slane %v633, 4
        %v635 = vadd.f32 %v633, %v634
        %v636 = vrot.slane %v635, 2
        %v637 = vadd.f32 %v635, %v636
        %v638 = vrot.slane %v637, 1
        %v639 = vadd.f32 %v637, %v638
        %v640 = vld [vmem:[%s3] sm:$0xff]
        %v641 = vld [vmem:[%s4] sm:$0x1]
        %v642 = vmul.f32 %v641, 8.0
        %v644 = vsel %vm595, %v639, 0
        %646 = vmatpush.msra.mxu0 0.0
        %647 = vmatpush.msra.mxu0 0.0
        %648 = vmatpush.msra.mxu0 0.0
        %649 = vmatpush.msra.mxu0 0.0
        %650 = vmatpush.msra.mxu0 0.0
        %651 = vmatpush.msra.mxu0 0.0
        %652 = vmatpush.msra.mxu0 0.0
        %653 = vmatpush.msra.mxu0 0.0
        %654 = vmatpush.msra.mxu0 0.0
        %655 = vmatpush.msra.mxu0 0.0
        %656 = vmatpush.msra.mxu0 0.0
        %657 = vmatpush.msra.mxu0 0.0
        %658 = vmatpush.msra.mxu0 0.0
        %659 = vmatpush.msra.mxu0 0.0
        %660 = vmatpush.msra.mxu0 0.0
        %661 = vmatpush.msra.mxu0 %v640
        %662 = vmatmul.f32.gmra.mxu0 %v644
        %v663 = vpop.f32.mrf.mxu0
        %v664 = vadd.f32 %v642, %v663
        %665 = vdwg.mxu0
        %v666 = vperm.slane %v664, 0
        %v667 = vadd.f32 %v592, %v666
        %v668 = vld [vmem:[#allocation2] sm:$0x1]
        %v669 = vld [vmem:[#allocation5] sm:$0x1]
        %v670 = vsel %vm595, %v667, 0.0
        %671 = vadd.xlane.f32.xlu0 %v670
        %v672 = vpop.xlane.xlu0 %671
        %v673 = vmul.f32 %v672, %v605
        %v674 = vsub.f32 %v667, %v673
        %v675 = vmul.f32 %v674, %v674
        %v676 = vsel %vm595, %v675, 0.0
        %677 = vadd.xlane.f32.xlu0 %v676
        %v678 = vpop.xlane.xlu0 %677
        %v679 = vmul.f32 %v678, %v605
        %v680 = vadd.f32 %v679, 1e-05
        %v681 = vrsqrt.pop %v680
        %v682 = vmul.f32 %v681, %v680
        %v683 = vmul.f32 %v682, %v681
        %v684 = vmul.f32 0.5, %v683
        %v685 = vsub.f32 1.5, %v684
        %v686 = vmul.f32 %v681, %v685
        %vm687 = vweird.f32 %v680
        %vm688 = vweird.f32 %v681
        %vm689 = vmor %vm687, %vm688
        %v690 = vsel %vm689, %v681, %v686
        %v691 = vmul.f32 %v674, %v690
        %v693 = vperm.slane %v668, 0
        %v695 = vmul.f32 %v691, %v693
        %v697 = vperm.slane %v669, 0
        %v699 = vadd.f32 %v695, %v697
        %v700 = vsel %vm595, %v699, 0.0
        %v701 = vrot.slane %v700, 4
        %v702 = vadd.f32 %v700, %v701
        %v703 = vrot.slane %v702, 2
        %v704 = vadd.f32 %v702, %v703
        %v705 = vrot.slane %v704, 1
        %v706 = vadd.f32 %v704, %v705
        %v707 = vld [vmem:[%s7] sm:$0xff]
        %v708 = vld [vmem:[#allocation7] sm:$0x1]
        %v709 = vmul.f32 %v708, 8.0
        %v711 = vsel %vm595, %v706, 0
        %713 = vmatpush.msra.mxu0 0.0
        %714 = vmatpush.msra.mxu0 0.0
        %715 = vmatpush.msra.mxu0 0.0
        %716 = vmatpush.msra.mxu0 0.0
        %717 = vmatpush.msra.mxu0 0.0
        %718 = vmatpush.msra.mxu0 0.0
        %719 = vmatpush.msra.mxu0 0.0
        %720 = vmatpush.msra.mxu0 0.0
        %721 = vmatpush.msra.mxu0 0.0
        %722 = vmatpush.msra.mxu0 0.0
        %723 = vmatpush.msra.mxu0 0.0
        %724 = vmatpush.msra.mxu0 0.0
        %725 = vmatpush.msra.mxu0 0.0
        %726 = vmatpush.msra.mxu0 0.0
        %727 = vmatpush.msra.mxu0 0.0
        %728 = vmatpush.msra.mxu0 %v707
        %729 = vmatmul.f32.gmra.mxu0 %v711
        %v730 = vpop.f32.mrf.mxu0
        %v731 = vadd.f32 %v709, %v730
        %732 = vdwg.mxu0
        %v733 = vperm.slane %v731, 0
        %v734 = vadd.f32 %v667, %v733
        %v735 = vld [vmem:[%s9] sm:$0xff]
        %v736 = vld [vmem:[#allocation8] sm:$0x1]
        %v738 = vperm.slane %v736, 0
        %v741 = vsel %vm595, %v734, 0
        %743 = vmatpush.msra.mxu0 0.0
        %744 = vmatpush.msra.mxu0 0.0
        %745 = vmatpush.msra.mxu0 0.0
        %746 = vmatpush.msra.mxu0 0.0
        %747 = vmatpush.msra.mxu0 0.0
        %748 = vmatpush.msra.mxu0 0.0
        %749 = vmatpush.msra.mxu0 0.0
        %750 = vmatpush.msra.mxu0 0.0
        %751 = vmatpush.msra.mxu0 0.0
        %752 = vmatpush.msra.mxu0 0.0
        %753 = vmatpush.msra.mxu0 0.0
        %754 = vmatpush.msra.mxu0 0.0
        %755 = vmatpush.msra.mxu0 0.0
        %756 = vmatpush.msra.mxu0 0.0
        %757 = vmatpush.msra.mxu0 0.0
        %758 = vmatpush.msra.mxu0 %v735
        %759 = vmatmul.f32.gmra.mxu0 %v741
        %v760 = vpop.f32.mrf.mxu0
        %v761 = vadd.f32 %v738, %v760
        %762 = vdwg.mxu0
        %v763 = vmax.f32 %v761, 0.0
        %v764 = vld [vmem:[%s11] sm:$0xff]
        %v765 = vld [vmem:[%s11 + $0x8] sm:$0xff]
        %v766 = vld [vmem:[%s11 + $0x10] sm:$0xff]
        %v767 = vld [vmem:[%s11 + $0x18] sm:$0xff]
        %vm768 = vcmask 261120
        %v770 = vsel %vm768, %v763, 0
        %772 = vmatpush.msra.mxu0 0.0
        %773 = vmatpush.msra.mxu0 0.0
        %774 = vmatpush.msra.mxu0 0.0
        %775 = vmatpush.msra.mxu0 0.0
        %776 = vmatpush.msra.mxu0 0.0
        %777 = vmatpush.msra.mxu0 0.0
        %778 = vmatpush.msra.mxu0 0.0
        %779 = vmatpush.msra.mxu0 0.0
        %780 = vmatpush.msra.mxu0 0.0
        %781 = vmatpush.msra.mxu0 0.0
        %782 = vmatpush.msra.mxu0 0.0
        %783 = vmatpush.msra.mxu0 0.0
        %784 = vmatpush.msra.mxu0 %v767
        %785 = vmatpush.msra.mxu0 %v766
        %786 = vmatpush.msra.mxu0 %v765
        %787 = vmatpush.msra.mxu0 %v764
        %788 = vmatmul.f32.gmra.mxu0 %v770
        %v789 = vpop.f32.mrf.mxu0
        %v790 = vadd.f32 0.0, %v789
        %791 = vdwg.mxu0
        %v792 = vadd.f32 %v734, %v790
        %v793 = vld [vmem:[#allocation10] sm:$0x1]
        %v795 = vperm.slane %v793, 0
        %v797 = vadd.f32 %v792, %v795
        %v798 = vld [vmem:[#allocation11] sm:$0x1]
        %v799 = vld [vmem:[#allocation13] sm:$0x1]
        %v800 = vsel %vm595, %v797, 0.0
        %801 = vadd.xlane.f32.xlu0 %v800
        %v802 = vpop.xlane.xlu0 %801
        %v803 = vmul.f32 %v802, %v605
        %v804 = vsub.f32 %v797, %v803
        %v805 = vmul.f32 %v804, %v804
        %v806 = vsel %vm595, %v805, 0.0
        %807 = vadd.xlane.f32.xlu0 %v806
        %v808 = vpop.xlane.xlu0 %807
        %v809 = vmul.f32 %v808, %v605
        %v810 = vadd.f32 %v809, 1e-05
        %v811 = vrsqrt.pop %v810
        %v812 = vmul.f32 %v811, %v810
        %v813 = vmul.f32 %v812, %v811
        %v814 = vmul.f32 0.5, %v813
        %v815 = vsub.f32 1.5, %v814
        %v816 = vmul.f32 %v811, %v815
        %vm817 = vweird.f32 %v810
        %vm818 = vweird.f32 %v811
        %vm819 = vmor %vm817, %vm818
        %v820 = vsel %vm819, %v811, %v816
        %v821 = vmul.f32 %v804, %v820
        %v823 = vperm.slane %v798, 0
        %v825 = vmul.f32 %v821, %v823
        %v827 = vperm.slane %v799, 0
        %v829 = vadd.f32 %v825, %v827
        %830 = vst.msk [vmem:[%s587] sm:$0xff] %vm595, %v829
        %s831 = sand.u32 %s361, 1
        %s832 = scalar_lea.sflag [#allocation4], %s831
        %s833 = sand.u32 %s361, 1
        %s834 = smul.addr %s833, 8
        %s835 = scalar_lea.vmem [#allocation14], %s834
        // Predicated region
        $region109: #{transformer_decoder_layer_ga.1} parent=79 // pred_check
          %p836 = pneg %p371
        $region110: #{transformer_decoder_layer_ga.1} parent=79 // pred_check_branch
          %838 = sbr.rel (%p836) target = $region112
        $region111: #{transformer_decoder_layer_ga.1} parent=79 // pred_region
          %840 = vsyncadd %s832, 0
          %s841 = smul.addr %s33, 8
          %s842 = scalar_lea.hbm %s15, %s841
          %s844 = sshll.u32 %s835, 4
          %s845 = int_to_ptr.vmem [resolvable:$true] %s844
          %s846 = sshll.u32 %s842, 4
          %s847 = int_to_ptr.hbm [resolvable:$true] %s846
          %849 = dma.vmem_to_hbm [thread:$0]  %s845, 128, %s847, %s832
        $region112: #{transformer_decoder_layer_ga.1} parent=79 // pred_fallthru
          _
      $region80: #{transformer_decoder_layer_ga.1} parent=5 // pred_fallthru
        _
      %p850 = scmp.le.s32.totalorder 2, %s28
      // Predicated region
      $region113: #{transformer_decoder_layer_ga.1} parent=5 // pred_check
        %p851 = pneg %p850
      $region114: #{transformer_decoder_layer_ga.1} parent=5 // pred_check_branch
        %853 = sbr.rel (%p851) target = $region116
      $region115: #{transformer_decoder_layer_ga.1} parent=5 // pred_region
        %s854 = ssub.s32 %s28, 2
        // Predicated region
        $region117: #{transformer_decoder_layer_ga.1} parent=115 // pred_check
          %p855 = pneg %p377
        $region118: #{transformer_decoder_layer_ga.1} parent=115 // pred_check_branch
          %857 = sbr.rel (%p855) target = $region120
        $region119: #{transformer_decoder_layer_ga.1} parent=115 // pred_region
          %s858 = sand.u32 %s362, 1
          %s859 = scalar_lea.sflag [#allocation4], %s858
          %s860 = sand.u32 %s362, 1
          %s861 = smul.addr %s860, 8
          %s862 = scalar_lea.vmem [#allocation14], %s861
          %864 = dma.done %s859, 128
        $region120: #{transformer_decoder_layer_ga.1} parent=115 // pred_fallthru
          _
      $region116: #{transformer_decoder_layer_ga.1} parent=5 // pred_fallthru
        _
    $region6: #{transformer_decoder_layer_ga.1} parent=1 // loop_footer
      %s32 = sadd.s32 1, %s28
    $region7: #{transformer_decoder_layer_ga.1} parent=1 // loop_footer_branch
      %27 = sbr.rel target = $region3
    $region8: #{transformer_decoder_layer_ga.1} parent=1 // loop_exit
      _
    %865 = vsyncpa [#allocation3], 1
    %s866 = scalar_lea.sflag [#allocation3], 1
    %867 = vsyncpa %s866, 1
    %868 = vsyncpa [#allocation6], 1
    %869 = vsyncpa [#allocation9], 1
    %870 = vsyncpa [#allocation12], 1
    %871 = vsyncpa [#allocation4], 1
    %s872 = scalar_lea.sflag [#allocation4], 1
    %873 = vsyncpa %s872, 1

</llo_original>
